<compile_context>
chip_gen: v5e
topology: v5e:2x2
jax: 0.10.0
libtpu: 0.0.40
codegen_flags: <defaults>
</compile_context>

<pallas_src>
import functools

import jax
import jax.numpy as jnp
from jax.experimental import pallas as pl
from jax.experimental.pallas import tpu as pltpu


def _cdiv(a: int, b: int) -> int:
    return -(-a // b)


def _round_up(x: int, m: int) -> int:
    return _cdiv(x, m) * m


def _round_down(x: int, m: int) -> int:
    return (x // m) * m


def _rmsnorm_kernel(x_ref, scale_ref, o_ref, *, eps: float):
    # x_ref: (ROW_TILE, H), scale_ref: (1, H), o_ref: (ROW_TILE, H)
    hidden = x_ref.shape[-1]
    xf = x_ref[...].astype(jnp.float32)
    # mean(x*x, -1) accumulated in f32, rsqrt on the EUP.
    sumsq = jnp.sum(xf * xf, axis=-1, keepdims=True)
    inv = jax.lax.rsqrt(sumsq * (1.0 / hidden) + eps)
    scale = scale_ref[...].astype(jnp.float32)
    o_ref[...] = (xf * inv * scale).astype(o_ref.dtype)


def _tpu_vmem_and_cores():
    """Best-effort query of per-core VMEM capacity and TensorCores per chip."""
    vmem_cap = 64 * 1024 * 1024  # conservative fallback (v7x per-TC)
    num_cores = 1
    try:
        info = pltpu.get_tpu_info()
        vmem_cap = int(getattr(info, "vmem_capacity_bytes", vmem_cap))
        for attr in ("num_cores", "tensorcores_per_chip", "core_count"):
            v = getattr(info, attr, None)
            if v:
                num_cores = int(v)
                break
    except Exception:  # pragma: no cover - robust fallback
        pass
    return max(1, vmem_cap), max(1, num_cores)


def lit_rmsnorm(x: jax.Array, scale: jax.Array, eps: float = 1e-5) -> jax.Array:
    """RMSNorm over the last axis: scale * x * rsqrt(mean(x*x, -1) + eps)."""
    orig_shape = x.shape
    hidden = orig_shape[-1]
    assert scale.shape == (hidden,)

    x2d = x.reshape(-1, hidden)
    rows = x2d.shape[0]

    itemsize = jnp.dtype(x.dtype).itemsize
    packing = max(8, 32 // itemsize)  # sublane packing: f32 8, bf16 16, int8 32

    vmem_cap, num_cores = _tpu_vmem_and_cores()
    vmem_budget = vmem_cap * 3 // 4  # headroom for compiler scratch

    row_bytes = hidden * itemsize
    # Per-block byte target: ~8 MiB on 128 MiB-VMEM parts, ~4 MiB on 64 MiB v7x.
    target_block_bytes = min(8 << 20, vmem_cap // 16)
    rows_from_target = max(1, target_block_bytes // row_bytes)
    # Double-buffered input + output blocks must fit the VMEM budget.
    rows_from_budget = max(1, (vmem_budget - (2 << 20)) // (4 * row_bytes))

    row_tile = min(rows, rows_from_target, rows_from_budget)
    if row_tile < rows:
        row_tile = max(packing, _round_down(row_tile, packing))
        if num_cores > 1:
            # Keep the step count a multiple of the core count so the
            # "parallel" row axis stays balanced across TensorCores.
            n_steps = _cdiv(rows, row_tile)
            if n_steps > 1:
                n_steps = _round_up(n_steps, num_cores)
                row_tile = max(packing, _round_up(_cdiv(rows, n_steps), packing))
    # else: row_tile == rows -> single full-extent block (legal for any size).

    grid = (_cdiv(rows, row_tile),)
    scale2d = scale.reshape(1, hidden)

    block_bytes = row_tile * row_bytes
    needed = 4 * block_bytes + 4 * hidden * jnp.dtype(scale.dtype).itemsize + (2 << 20)
    vmem_limit = int(min(vmem_budget, max(needed, 16 << 20)))
    if vmem_limit < needed:  # pathological huge-hidden case
        vmem_limit = int(min(needed, vmem_cap))

    out = pl.pallas_call(
        functools.partial(_rmsnorm_kernel, eps=eps),
        out_shape=jax.ShapeDtypeStruct((rows, hidden), x.dtype),
        grid_spec=pltpu.PrefetchScalarGridSpec(
            num_scalar_prefetch=0,
            grid=grid,
            in_specs=[
                pl.BlockSpec((row_tile, hidden), lambda i: (i, 0)),
                # Constant index_map -> scale block stays resident, no re-DMA.
                pl.BlockSpec((1, hidden), lambda i: (0, 0)),
            ],
            out_specs=pl.BlockSpec((row_tile, hidden), lambda i: (i, 0)),
        ),
        compiler_params=pltpu.CompilerParams(
            dimension_semantics=("parallel",),
            vmem_limit_bytes=vmem_limit,
        ),
    )(x2d, scale2d)

    return out.reshape(orig_shape)


if __name__ == "__main__":
    key = jax.random.PRNGKey(0)

    batch, seq, hidden = 2, 8, 32
    x = jax.random.normal(key, (batch, seq, hidden), dtype=jnp.float32)

    # Module __init__: self.scale = nn.Parameter(torch.ones(size))
    scale = jnp.ones((hidden,), dtype=jnp.float32)
    eps = 1e-5

    y = lit_rmsnorm(x, scale, eps)
    y = jax.block_until_ready(y)

    # Reference (plain JAX) check of the forward semantics.
    norm_x = jnp.mean(x * x, axis=-1, keepdims=True)
    y_ref = scale * (x * jax.lax.rsqrt(norm_x + eps))
    assert y.shape == x.shape and y.dtype == x.dtype
    assert jnp.allclose(y, y_ref, atol=1e-5, rtol=1e-5)

    print("KERNEL_OK")
</pallas_src>

<mosaic_0001>
module attributes {stable_mosaic.version = 11 : i64} {
  func.func @_rmsnorm_kernel(%arg0: i32, %arg1: memref<16x32xf32, #tpu.memory_space<vmem>>, %arg2: memref<1x32xf32, #tpu.memory_space<vmem>>, %arg3: memref<16x32xf32, #tpu.memory_space<vmem>>) attributes {dimension_semantics = [#tpu.dimension_semantics<parallel>], iteration_bounds = array<i64: 1>, scalar_prefetch = 0 : i64, scratch_operands = 0 : i64, tpu.core_type = #tpu.core_type<tc>, window_params = [{transform_indices = @transform_0, window_bounds = array<i64: 16, 32>}, {pipeline_mode = #tpu.pipeline_mode<synchronous>, transform_indices = @transform_1, window_bounds = array<i64: 1, 32>}, {transform_indices = @transform_2, window_bounds = array<i64: 16, 32>}]} {
    %c0 = arith.constant 0 : index
    %c0_0 = arith.constant 0 : index
    %0 = vector.load %arg1[%c0, %c0_0] : memref<16x32xf32, #tpu.memory_space<vmem>>, vector<16x32xf32>
    %1 = arith.mulf %0, %0 : vector<16x32xf32>
    %cst = arith.constant dense<0.000000e+00> : vector<16xf32>
    %2 = vector.multi_reduction <add>, %1, %cst [1] : vector<16x32xf32> to vector<16xf32>
    %3 = vector.shape_cast %2 : vector<16xf32> to vector<16x1xf32>
    %cst_1 = arith.constant 3.125000e-02 : f32
    %4 = vector.broadcast %cst_1 : f32 to vector<16x1xf32>
    %5 = arith.mulf %3, %4 : vector<16x1xf32>
    %cst_2 = arith.constant 9.99999974E-6 : f32
    %6 = vector.broadcast %cst_2 : f32 to vector<16x1xf32>
    %7 = arith.addf %5, %6 : vector<16x1xf32>
    %8 = math.rsqrt %7 : vector<16x1xf32>
    %c0_3 = arith.constant 0 : index
    %c0_4 = arith.constant 0 : index
    %9 = vector.load %arg2[%c0_3, %c0_4] : memref<1x32xf32, #tpu.memory_space<vmem>>, vector<1x32xf32>
    %10 = vector.broadcast %8 : vector<16x1xf32> to vector<16x32xf32>
    %11 = arith.mulf %0, %10 : vector<16x32xf32>
    %12 = vector.broadcast %9 : vector<1x32xf32> to vector<16x32xf32>
    %13 = arith.mulf %11, %12 : vector<16x32xf32>
    %c0_5 = arith.constant 0 : index
    %c0_6 = arith.constant 0 : index
    %14 = vector.load %arg3[%c0_5, %c0_6] : memref<16x32xf32, #tpu.memory_space<vmem>>, vector<16x32xf32>
    tpu.vector_store %arg3[%c0_5, %c0_6], %13 {strides = array<i32>} : memref<16x32xf32, #tpu.memory_space<vmem>>, vector<16x32xf32>,
    return
  }
  func.func @transform_0(%arg0: i32) -> (i32, i32) {
    %c0_i32 = arith.constant 0 : i32
    %c0_i32_0 = arith.constant 0 : i32
    return %arg0, %c0_i32 : i32, i32
  }
  func.func @transform_1(%arg0: i32) -> (i32, i32) {
    %c0_i32 = arith.constant 0 : i32
    %c0_i32_0 = arith.constant 0 : i32
    %c0_i32_1 = arith.constant 0 : i32
    return %c0_i32, %c0_i32_0 : i32, i32
  }
  func.func @transform_2(%arg0: i32) -> (i32, i32) {
    %c0_i32 = arith.constant 0 : i32
    %c0_i32_0 = arith.constant 0 : i32
    return %arg0, %c0_i32 : i32, i32
  }
}

</mosaic_0001>

<llo_original>
// kernel: tpu_custom_call.1
$region0: #{tpu_custom_call.1}
  #allocation0 [shape = 'u32[]', space=smem, size = 0x4, offset = 0x4, fixed_abs, tag = 'smem constant byte address 0x4 - core index']
  #allocation1 [shape = 'u32[72,128]{1,0:T(1,128)}', space=vmem, size = 0x9000, scoped, tag = 'internal scratch']
  %s0 = inlined_call_operand.hbm [shape: f32[16,32], index: 0, kind: input, shape index: {}]
  %s1 = inlined_call_operand.hbm [shape: f32[1,32], index: 1, kind: input, shape index: {}]
  %s2 = inlined_call_operand.hbm [shape: f32[16,32], index: 2, kind: output, shape index: {}]
  %s3 = sld [smem:[#allocation0]]
  $region26: #{tpu_custom_call.1} parent=0
    _
  %s5 = ssub.s32 1, %s3
  %s6 = scalar_select 0, %s5, %s3
  $region1: #{tpu_custom_call.1} parent=0
    #allocation2 [shape = 'u8[8192]{0}', space=vmem, size = 0x2000, scoped, tag = 'input window, operand 0, single buffered']
    #allocation3 [shape = 's32[1]{0}', space=sflag, size = 0x4, scoped, tag = 'scoped memory for tpu_custom_call.1']
    #allocation4 [shape = 's32[1]{0}', space=sflag, size = 0x4, scoped, tag = 'scoped memory for tpu_custom_call.1']
    #allocation5 [shape = 'u8[512]{0}', space=vmem, size = 0x400, scoped, tag = 'input window, operand 1, single buffered']
    #allocation6 [shape = 's32[1]{0}', space=sflag, size = 0x4, scoped, tag = 'scoped memory for tpu_custom_call.1']
    #allocation7 [shape = 'u8[8192]{0}', space=vmem, size = 0x2000, scoped, tag = 'output window, operand 0, single buffered']
    %7 = vsyncpa [#allocation3], 0
    %8 = vsyncpa [#allocation6], 0
    %9 = vsyncpa [#allocation4], 0
    // Predicated region
    $region2: #{tpu_custom_call.1} parent=1 // pred_check
      _
    $region3: #{tpu_custom_call.1} parent=1 // pred_check_branch
      %11 = sbr.rel (0) target = $region5
    $region4: #{tpu_custom_call.1} parent=1 // pred_region
      %13 = vsyncadd [#allocation3], 0
      %s14 = sshll.u32 %s0, 4
      %s15 = int_to_ptr.hbm [resolvable:$true] %s14
      %s16 = sshll.u32 [#allocation2], 4
      %s17 = int_to_ptr.vmem [resolvable:$true] %s16
      %22 = dma.hbm_to_vmem [thread:$0]  %s15, 256, %s17, [#allocation3], 128, 128, 8
    $region5: #{tpu_custom_call.1} parent=1 // pred_fallthru
      _
    // Predicated region
    $region6: #{tpu_custom_call.1} parent=1 // pred_check
      _
    $region7: #{tpu_custom_call.1} parent=1 // pred_check_branch
      %24 = sbr.rel (0) target = $region9
    $region8: #{tpu_custom_call.1} parent=1 // pred_region
      %26 = vsyncadd [#allocation6], 0
      %s28 = sshll.u32 %s1, 4
      %s29 = int_to_ptr.hbm [resolvable:$true] %s28
      %s30 = sshll.u32 [#allocation5], 4
      %s31 = int_to_ptr.vmem [resolvable:$true] %s30
      %33 = dma.hbm_to_vmem [thread:$0]  %s29, 16, %s31, [#allocation6]
    $region9: #{tpu_custom_call.1} parent=1 // pred_fallthru
      _
    // Predicated region
    $region10: #{tpu_custom_call.1} parent=1 // pred_check
      _
    $region11: #{tpu_custom_call.1} parent=1 // pred_check_branch
      %35 = sbr.rel (0) target = $region13
    $region12: #{tpu_custom_call.1} parent=1 // pred_region
      %37 = dma.done [#allocation3], 256
    $region13: #{tpu_custom_call.1} parent=1 // pred_fallthru
      _
    // Predicated region
    $region14: #{tpu_custom_call.1} parent=1 // pred_check
      _
    $region15: #{tpu_custom_call.1} parent=1 // pred_check_branch
      %39 = sbr.rel (0) target = $region17
    $region16: #{tpu_custom_call.1} parent=1 // pred_region
      %41 = dma.done [#allocation6], 16
    $region17: #{tpu_custom_call.1} parent=1 // pred_fallthru
      _
    %v42 = vld [vmem:[#allocation2] sm:$0xff]
    %v43 = vld [vmem:[#allocation2 + $0x8] sm:$0xff]
    %v44 = vmul.f32 %v42, %v42
    %v45 = vmul.f32 %v43, %v43
    %vm46 = vcmask 261120
    %v47 = vsel %vm46, %v44, 0.0
    %48 = vadd.xlane.f32.xlu0 %v47
    %v49 = vpop.xlane.xlu0 %48
    %v50 = vsel %vm46, %v45, 0.0
    %51 = vadd.xlane.f32.xlu0 %v50
    %v52 = vpop.xlane.xlu0 %51
    %v53 = vmul.f32 %v49, 0.03125
    %v54 = vmul.f32 %v52, 0.03125
    %v55 = vadd.f32 %v53, 1e-05
    %v56 = vadd.f32 %v54, 1e-05
    %v57 = vrsqrt.pop %v55
    %v58 = vmul.f32 %v57, %v55
    %v59 = vmul.f32 %v58, %v57
    %v60 = vmul.f32 0.5, %v59
    %v61 = vsub.f32 1.5, %v60
    %v62 = vmul.f32 %v57, %v61
    %vm63 = vweird.f32 %v55
    %vm64 = vweird.f32 %v57
    %vm65 = vmor %vm63, %vm64
    %v66 = vsel %vm65, %v57, %v62
    %v67 = vrsqrt.pop %v56
    %v68 = vmul.f32 %v67, %v56
    %v69 = vmul.f32 %v68, %v67
    %v70 = vmul.f32 0.5, %v69
    %v71 = vsub.f32 1.5, %v70
    %v72 = vmul.f32 %v67, %v71
    %vm73 = vweird.f32 %v56
    %vm74 = vweird.f32 %v67
    %vm75 = vmor %vm73, %vm74
    %v76 = vsel %vm75, %v67, %v72
    %v77 = vld [vmem:[#allocation5] sm:$0x1]
    %v78 = vmul.f32 %v42, %v66
    %v79 = vmul.f32 %v43, %v76
    %v81 = vperm.slane %v77, 0
    %v83 = vmul.f32 %v78, %v81
    %v84 = vmul.f32 %v79, %v81
    %85 = vst.msk [vmem:[#allocation7] sm:$0xff] %vm46, %v83
    %86 = vst.msk [vmem:[#allocation7 + $0x8] sm:$0xff] %vm46, %v84
    // Predicated region
    $region18: #{tpu_custom_call.1} parent=1 // pred_check
      _
    $region19: #{tpu_custom_call.1} parent=1 // pred_check_branch
      %88 = sbr.rel (0) target = $region21
    $region20: #{tpu_custom_call.1} parent=1 // pred_region
      %90 = vsyncadd [#allocation4], 0
      %s91 = sshll.u32 [#allocation7], 4
      %s92 = int_to_ptr.vmem [resolvable:$true] %s91
      %s93 = sshll.u32 %s2, 4
      %s94 = int_to_ptr.hbm [resolvable:$true] %s93
      %99 = dma.vmem_to_hbm [thread:$0]  %s92, 256, %s94, [#allocation4], 128, 128, 8
    $region21: #{tpu_custom_call.1} parent=1 // pred_fallthru
      _
    // Predicated region
    $region22: #{tpu_custom_call.1} parent=1 // pred_check
      _
    $region23: #{tpu_custom_call.1} parent=1 // pred_check_branch
      %101 = sbr.rel (0) target = $region25
    $region24: #{tpu_custom_call.1} parent=1 // pred_region
      %103 = dma.done [#allocation4], 256
    $region25: #{tpu_custom_call.1} parent=1 // pred_fallthru
      _
    %104 = vsyncpa [#allocation3], 1
    %105 = vsyncpa [#allocation6], 1
    %106 = vsyncpa [#allocation4], 1

</llo_original>
